<compile_context>
chip_gen: v7x
topology: tpu7x:2x2x1
jax: 0.10.0
libtpu: 0.0.40
codegen_flags: <defaults>
</compile_context>

<pallas_src>
import functools

import jax
import jax.numpy as jnp
from jax.experimental import pallas as pl
from jax.experimental.pallas import tpu as pltpu  # noqa: F401  (TPU backend)


def _pack_params(hidden_params, out_params, param_dtype=jnp.float32):
    """Pack [(W[in,out], b[out]), ...] into one padded 2-D slab.

    Per-layer block layout (rows):
        [ pad8(in) rows of W (zero-padded)      ]
        [ 8 rows; row 0 holds the bias, rest 0  ]
    All row offsets are multiples of 8 (sublane-aligned static slices).
    Returns (slab [total_rows, max_out], layout tuple of
    (row_off, in_f, out_f, bias_row)).
    """
    layers = list(hidden_params) + [out_params]
    max_out = max(w.shape[1] for (w, _) in layers)
    blocks = []
    layout = []
    row_off = 0
    for (w, b) in layers:
        in_f, out_f = w.shape
        in_pad = in_f + (-in_f % 8)
        w_blk = jnp.zeros((in_pad, max_out), dtype=param_dtype)
        w_blk = w_blk.at[:in_f, :out_f].set(w.astype(param_dtype))
        b_blk = jnp.zeros((8, max_out), dtype=param_dtype)
        b_blk = b_blk.at[0, :out_f].set(b.astype(param_dtype))
        blocks += [w_blk, b_blk]
        layout.append((row_off, in_f, out_f, row_off + in_pad))
        row_off += in_pad + 8
    slab = jnp.concatenate(blocks, axis=0)
    return slab, tuple(layout)


def _mlp_fused_kernel(x_ref, p_ref, o_ref, *, layout, hidden_act, output_act):
    """Fully fused MLP: x_ref [B, IN], p_ref = packed param slab, o_ref [B, OUT]."""
    h = x_ref[...]
    n_layers = len(layout)

    for li, (row_off, in_f, out_f, bias_row) in enumerate(layout):
        # Static slices of the VMEM slab — zero-cost views, sublane-aligned.
        w = p_ref[row_off:row_off + in_f, :out_f].astype(jnp.float32)
        b = p_ref[bias_row:bias_row + 1, :out_f].astype(jnp.float32)
        h = jnp.dot(h, w, preferred_element_type=jnp.float32) + b

        if li < n_layers - 1:  # hidden layer activation
            if hidden_act == "tanh":
                h = jnp.tanh(h)
            elif hidden_act == "relu":
                h = jnp.maximum(h, 0.0)
            elif hidden_act == "none":
                pass
            else:
                raise ValueError(f"unknown hidden activation: {hidden_act}")

    if output_act == "softmax":
        # Numerically-stable softmax; EXACT division so rows sum to 1.
        m = jnp.max(h, axis=-1, keepdims=True)
        e = jnp.exp(h - m)
        h = e / jnp.sum(e, axis=-1, keepdims=True)
    elif output_act == "none":
        pass
    else:
        raise ValueError(f"unknown output activation: {output_act}")

    o_ref[...] = h.astype(o_ref.dtype)


def mlp_forward(x, slab, layout, hidden_act, output_act):
    """Fused forward: x [B, IN] f32, slab = packed params, layout = slab map."""
    B = x.shape[0]
    n_out = layout[-1][2]
    n_layers = len(layout)

    # Advisory cost estimate for XLA's scheduler.
    flops = 0
    transcendentals = 0
    bytes_accessed = (x.size * x.dtype.itemsize
                      + slab.size * slab.dtype.itemsize
                      + B * n_out * 4)
    for li, (_, in_f, out_f, _) in enumerate(layout):
        flops += 2 * B * in_f * out_f + B * out_f
        if li < n_layers - 1 and hidden_act == "tanh":
            transcendentals += B * out_f
    if output_act == "softmax":
        transcendentals += B * (n_out + 1)

    kernel = functools.partial(
        _mlp_fused_kernel,
        layout=layout,
        hidden_act=hidden_act,
        output_act=output_act,
    )

    return pl.pallas_call(
        kernel,
        out_shape=jax.ShapeDtypeStruct((B, n_out), jnp.float32),
        in_specs=[
            pl.BlockSpec(x.shape, lambda: (0, 0)),      # 1 DMA: activations
            pl.BlockSpec(slab.shape, lambda: (0, 0)),   # 1 DMA: all params
        ],
        out_specs=pl.BlockSpec((B, n_out), lambda: (0, 0)),
        cost_estimate=pl.CostEstimate(
            flops=flops,
            transcendentals=transcendentals,
            bytes_accessed=bytes_accessed,
        ),
    )(x, slab)


class PolicyNetPallas:
    """JAX/Pallas port of the PyTorch PolicyNet MLP (fully-fused forward)."""

    def __init__(self, N_inputs, N_outputs, N_hidden_layers, N_hidden_nodes,
                 activation="tanh", output_activation="softmax",
                 param_dtype=jnp.float32, key=None):
        if key is None:
            key = jax.random.PRNGKey(0)
        self.activation = activation
        self.output_activation = output_activation

        params = []
        dims = [N_inputs] + [N_hidden_nodes] * N_hidden_layers
        # hidden layers (PyTorch nn.Linear default uniform init range)
        for n in range(N_hidden_layers):
            key, kw, kb = jax.random.split(key, 3)
            fan_in = dims[n]
            bound = 1.0 / (fan_in ** 0.5)
            w = jax.random.uniform(kw, (dims[n], dims[n + 1]),
                                   minval=-bound, maxval=bound,
                                   dtype=jnp.float32)
            bb = jax.random.uniform(kb, (dims[n + 1],),
                                    minval=-bound, maxval=bound,
                                    dtype=jnp.float32)
            params.append((w, bb))
        # output layer
        key, kw, kb = jax.random.split(key, 3)
        bound = 1.0 / (N_hidden_nodes ** 0.5)
        w = jax.random.uniform(kw, (N_hidden_nodes, N_outputs),
                               minval=-bound, maxval=bound, dtype=jnp.float32)
        bb = jax.random.uniform(kb, (N_outputs,),
                                minval=-bound, maxval=bound, dtype=jnp.float32)
        out_params = (w, bb)

        # keep f32 copies around for the reference check
        self.params = params
        self.out_params = out_params
        # pack once; the fused kernel reads only this slab
        self.slab, self.layout = _pack_params(params, out_params,
                                              param_dtype=param_dtype)

    def __call__(self, inp):
        # flatten everything but the batch dim (plain-JAX glue, like .reshape)
        x = inp.reshape(inp.shape[0], -1).astype(jnp.float32)
        out_act = (self.output_activation
                   if self.output_activation is not None else "none")
        return mlp_forward(x, self.slab, self.layout,
                           hidden_act=self.activation, output_act=out_act)


def _reference_forward(net, inp):
    """Pure-jnp reference (full-precision matmuls, exact softmax)."""
    out = inp.reshape(inp.shape[0], -1).astype(jnp.float32)
    hp = jax.lax.Precision.HIGHEST
    for (w, b) in net.params:
        out = jnp.tanh(jnp.dot(out, w, precision=hp) + b)
    w, b = net.out_params
    out = jnp.dot(out, w, precision=hp) + b
    if net.output_activation == "softmax":
        out = jax.nn.softmax(out, axis=-1)
    return out


if __name__ == "__main__":
    key = jax.random.PRNGKey(0)
    k_inp, k_net = jax.random.split(key)

    # small shapes: batch=2, observation = (4, 4) -> N_inputs=16 after flatten
    batch = 2
    obs_shape = (4, 4)
    N_inputs = obs_shape[0] * obs_shape[1]
    N_outputs = 8
    N_hidden_layers = 2
    N_hidden_nodes = 32

    net = PolicyNetPallas(N_inputs, N_outputs, N_hidden_layers, N_hidden_nodes,
                          activation="tanh", output_activation="softmax",
                          key=k_net)

    x = jax.random.normal(k_inp, (batch,) + obs_shape, dtype=jnp.float32)

    pred = net(x)
    pred = jax.block_until_ready(pred)

    ref = _reference_forward(net, x)
    assert pred.shape == (batch, N_outputs)
    # exact-division softmax -> tight tolerances
    assert jnp.allclose(pred, ref, atol=1e-4, rtol=1e-4), (pred, ref)
    # policy output is a proper probability distribution
    assert jnp.allclose(jnp.sum(pred, axis=-1), 1.0, atol=1e-5)

    print("KERNEL_OK")
</pallas_src>

<mosaic_0001>
module attributes {stable_mosaic.version = 11 : i64} {
  func.func @_mlp_fused_kernel(%arg0: memref<2x16xf32, #tpu.memory_space<vmem>>, %arg1: memref<104x32xf32, #tpu.memory_space<vmem>>, %arg2: memref<2x8xf32, #tpu.memory_space<vmem>>) attributes {dimension_semantics = [], scalar_prefetch = 0 : i64, scratch_operands = 0 : i64, tpu.core_type = #tpu.core_type<tc>} {
    %c0 = arith.constant 0 : index
    %c0_0 = arith.constant 0 : index
    %0 = vector.load %arg0[%c0, %c0_0] : memref<2x16xf32, #tpu.memory_space<vmem>>, vector<2x16xf32>
    %c0_1 = arith.constant 0 : index
    %c0_2 = arith.constant 0 : index
    %1 = vector.load %arg1[%c0_1, %c0_2] : memref<104x32xf32, #tpu.memory_space<vmem>>, vector<16x32xf32>
    %c16 = arith.constant 16 : index
    %c0_3 = arith.constant 0 : index
    %2 = vector.load %arg1[%c16, %c0_3] : memref<104x32xf32, #tpu.memory_space<vmem>>, vector<1x32xf32>
    %cst = arith.constant dense<0.000000e+00> : vector<2x32xf32>
    %3 = tpu.matmul %0, %1, %cst {dimension_numbers = #tpu.dot_dimension_numbers<[1], [0], [0], [1], [0, 0, 1, 1], [], []>} : vector<2x16xf32>, vector<16x32xf32>, vector<2x32xf32> -> vector<2x32xf32>
    %4 = vector.broadcast %2 : vector<1x32xf32> to vector<2x32xf32>
    %5 = arith.addf %3, %4 : vector<2x32xf32>
    %6 = math.tanh %5 : vector<2x32xf32>
    %c24 = arith.constant 24 : index
    %c0_4 = arith.constant 0 : index
    %7 = vector.load %arg1[%c24, %c0_4] : memref<104x32xf32, #tpu.memory_space<vmem>>, vector<32x32xf32>
    %c56 = arith.constant 56 : index
    %c0_5 = arith.constant 0 : index
    %8 = vector.load %arg1[%c56, %c0_5] : memref<104x32xf32, #tpu.memory_space<vmem>>, vector<1x32xf32>
    %cst_6 = arith.constant dense<0.000000e+00> : vector<2x32xf32>
    %9 = tpu.matmul %6, %7, %cst_6 {dimension_numbers = #tpu.dot_dimension_numbers<[1], [0], [0], [1], [0, 0, 1, 1], [], []>} : vector<2x32xf32>, vector<32x32xf32>, vector<2x32xf32> -> vector<2x32xf32>
    %10 = vector.broadcast %8 : vector<1x32xf32> to vector<2x32xf32>
    %11 = arith.addf %9, %10 : vector<2x32xf32>
    %12 = math.tanh %11 : vector<2x32xf32>
    %c64 = arith.constant 64 : index
    %c0_7 = arith.constant 0 : index
    %13 = vector.load %arg1[%c64, %c0_7] : memref<104x32xf32, #tpu.memory_space<vmem>>, vector<32x8xf32>
    %c96 = arith.constant 96 : index
    %c0_8 = arith.constant 0 : index
    %14 = vector.load %arg1[%c96, %c0_8] : memref<104x32xf32, #tpu.memory_space<vmem>>, vector<1x8xf32>
    %cst_9 = arith.constant dense<0.000000e+00> : vector<2x8xf32>
    %15 = tpu.matmul %12, %13, %cst_9 {dimension_numbers = #tpu.dot_dimension_numbers<[1], [0], [0], [1], [0, 0, 1, 1], [], []>} : vector<2x32xf32>, vector<32x8xf32>, vector<2x8xf32> -> vector<2x8xf32>
    %16 = vector.broadcast %14 : vector<1x8xf32> to vector<2x8xf32>
    %17 = arith.addf %15, %16 : vector<2x8xf32>
    %cst_10 = arith.constant dense<0xFF800000> : vector<2xf32>
    %18 = vector.multi_reduction <maximumf>, %17, %cst_10 [1] : vector<2x8xf32> to vector<2xf32>
    %19 = vector.shape_cast %18 : vector<2xf32> to vector<2x1xf32>
    %20 = vector.broadcast %19 : vector<2x1xf32> to vector<2x8xf32>
    %21 = arith.subf %17, %20 : vector<2x8xf32>
    %22 = math.exp %21 : vector<2x8xf32>
    %cst_11 = arith.constant dense<0.000000e+00> : vector<2xf32>
    %23 = vector.multi_reduction <add>, %22, %cst_11 [1] : vector<2x8xf32> to vector<2xf32>
    %24 = vector.shape_cast %23 : vector<2xf32> to vector<2x1xf32>
    %25 = vector.broadcast %24 : vector<2x1xf32> to vector<2x8xf32>
    %26 = arith.divf %22, %25 : vector<2x8xf32>
    %c0_12 = arith.constant 0 : index
    %c0_13 = arith.constant 0 : index
    %27 = vector.load %arg2[%c0_12, %c0_13] : memref<2x8xf32, #tpu.memory_space<vmem>>, vector<2x8xf32>
    tpu.vector_store %arg2[%c0_12, %c0_13], %26 {strides = array<i32>} : memref<2x8xf32, #tpu.memory_space<vmem>>, vector<2x8xf32>,
    return
  }
}

</mosaic_0001>

<llo_original>
// kernel: tpu_custom_call.1
$region0: #{tpu_custom_call.1}
  #allocation0 [shape = 'u32[]', space=smem, size = 0x4, offset = 0x4, fixed_abs, tag = 'smem constant byte address 0x4 - core index']
  #allocation1 [shape = 'u32[144,128]{1,0:T(1,128)}', space=vmem, size = 0x12000, scoped, tag = 'internal scratch']
  %s0 = inlined_call_operand.vmem [shape: f32[2,16], index: 0, kind: input, shape index: {}]
  %s1 = inlined_call_operand.vmem [shape: f32[104,32], index: 1, kind: input, shape index: {}]
  %s2 = inlined_call_operand.hbm [shape: f32[2,8], index: 2, kind: output, shape index: {}]
  %s3 = sld [smem:[#allocation0]]
  $region18: #{tpu_custom_call.1} parent=0
    _
  %s5 = ssub.s32 1, %s3
  %s6 = scalar_select 0, %s5, %s3
  $region1: #{tpu_custom_call.1} parent=0
    #allocation2 [shape = 'u8[1024]{0}', space=vmem, size = 0x400, scoped, tag = 'output window, operand 0, single buffered']
    #allocation3 [shape = 's32[1]{0}', space=sflag, size = 0x4, scoped, tag = 'scoped memory for tpu_custom_call.1']
    %7 = vsyncpa [#allocation3], 0
    // Predicated region
    $region2: #{tpu_custom_call.1} parent=1 // pred_check
      _
    $region3: #{tpu_custom_call.1} parent=1 // pred_check_branch
      %9 = sbr.rel (0) target = $region5
    $region4: #{tpu_custom_call.1} parent=1 // pred_region
      _
    $region5: #{tpu_custom_call.1} parent=1 // pred_fallthru
      _
    // Predicated region
    $region6: #{tpu_custom_call.1} parent=1 // pred_check
      _
    $region7: #{tpu_custom_call.1} parent=1 // pred_check_branch
      %11 = sbr.rel (0) target = $region9
    $region8: #{tpu_custom_call.1} parent=1 // pred_region
      _
    $region9: #{tpu_custom_call.1} parent=1 // pred_fallthru
      _
    %v12 = vld [vmem:[%s0] sm:$0x3]
    %v13 = vld [vmem:[%s1] sm:$0xff]
    %v14 = vld [vmem:[%s1 + $0x8] sm:$0xff]
    %v15 = vld [vmem:[%s1 + $0x10] sm:$0x1]
    %v16 = vlaneseq
    %v17 = vshrl.u32 %v16, 7
    %v18 = vsub.s32 0, %v17
    %v19 = vrot.slane %v15, %v18
    %vm20 = vcmask 130048
    %v22 = vsel %vm20, %v12, 0
    %24 = vmatprep.subr.mxu0 0.0
    %25 = vmatpush1.msra.mxu0 %v13
    %26 = vmatprep.subr.mxu0 0.0
    %27 = vmatpush1.msra.mxu0 %v14
    %28 = vmatprep.subr.mxu0 0.0
    %29 = vmatpush1.msra.mxu0 0.0
    %30 = vmatprep.subr.mxu0 0.0
    %31 = vmatpush1.msra.mxu0 0.0
    %32 = vmatprep.subr.mxu0 0.0
    %33 = vmatpush1.msra.mxu0 0.0
    %34 = vmatprep.subr.mxu0 0.0
    %35 = vmatpush1.msra.mxu0 0.0
    %36 = vmatprep.subr.mxu0 0.0
    %37 = vmatpush1.msra.mxu0 0.0
    %38 = vmatprep.subr.mxu0 0.0
    %39 = vmatpush1.msra.mxu0 0.0
    %40 = vmatprep.subr.mxu0 0.0
    %41 = vmatpush1.msra.mxu0 0.0
    %42 = vmatprep.subr.mxu0 0.0
    %43 = vmatpush1.msra.mxu0 0.0
    %44 = vmatprep.subr.mxu0 0.0
    %45 = vmatpush1.msra.mxu0 0.0
    %46 = vmatprep.subr.mxu0 0.0
    %47 = vmatpush1.msra.mxu0 0.0
    %48 = vmatprep.subr.mxu0 0.0
    %49 = vmatpush1.msra.mxu0 0.0
    %50 = vmatprep.subr.mxu0 0.0
    %51 = vmatpush1.msra.mxu0 0.0
    %52 = vmatprep.subr.mxu0 0.0
    %53 = vmatpush1.msra.mxu0 0.0
    %54 = vmatprep.subr.mxu0 0.0
    %55 = vmatpush1.msra.mxu0 0.0
    %56 = vmatprep.subr.mxu0 0.0
    %57 = vmatpush1.msra.mxu0 0.0
    %58 = vmatprep.subr.mxu0 0.0
    %59 = vmatpush1.msra.mxu0 0.0
    %60 = vmatprep.subr.mxu0 0.0
    %61 = vmatpush1.msra.mxu0 0.0
    %62 = vmatprep.subr.mxu0 0.0
    %63 = vmatpush1.msra.mxu0 0.0
    %64 = vmatprep.subr.mxu0 0.0
    %65 = vmatpush1.msra.mxu0 0.0
    %66 = vmatprep.subr.mxu0 0.0
    %67 = vmatpush1.msra.mxu0 0.0
    %68 = vmatprep.subr.mxu0 0.0
    %69 = vmatpush1.msra.mxu0 0.0
    %70 = vmatprep.subr.mxu0 0.0
    %71 = vmatpush1.msra.mxu0 0.0
    %72 = vmatprep.subr.mxu0 0.0
    %73 = vmatpush1.msra.mxu0 0.0
    %74 = vmatprep.subr.mxu0 0.0
    %75 = vmatpush1.msra.mxu0 0.0
    %76 = vmatprep.subr.mxu0 0.0
    %77 = vmatpush1.msra.mxu0 0.0
    %78 = vmatprep.subr.mxu0 0.0
    %79 = vmatpush1.msra.mxu0 0.0
    %80 = vmatprep.subr.mxu0 0.0
    %81 = vmatpush1.msra.mxu0 0.0
    %82 = vmatprep.subr.mxu0 0.0
    %83 = vmatpush1.msra.mxu0 0.0
    %84 = vmatprep.subr.mxu0 0.0
    %85 = vmatpush1.msra.mxu0 0.0
    %86 = vmatprep.subr.mxu0 0.0
    %87 = vmatpush1.msra.mxu0 0.0
    %88 = vmatprep.mubr.f32.mxu0 0.0
    %89 = vmatmul.mubr.f32.gmra.mrb[0].mxu0 %v22
    %v90 = vpop.f32.mrb[0].mxu0
    %v91 = vadd.f32 %v19, %v90
    %v92 = vpop.f32.mrb[0].mxu0
    %93 = vdwg.mxu0
    %v94 = vtanh.pop %v91
    %v95 = vld [vmem:[%s1 + $0x18] sm:$0xff]
    %v96 = vld [vmem:[%s1 + $0x20] sm:$0xff]
    %v97 = vld [vmem:[%s1 + $0x28] sm:$0xff]
    %v98 = vld [vmem:[%s1 + $0x30] sm:$0xff]
    %v99 = vld [vmem:[%s1 + $0x38] sm:$0x1]
    %v100 = vlaneseq
    %v101 = vshrl.u32 %v100, 7
    %v102 = vsub.s32 0, %v101
    %v103 = vrot.slane %v99, %v102
    %vm104 = vcmask 261120
    %v106 = vsel %vm104, %v94, 0
    %108 = vmatprep.subr.mxu0 0.0
    %109 = vmatpush1.msra.mxu0 %v95
    %110 = vmatprep.subr.mxu0 0.0
    %111 = vmatpush1.msra.mxu0 %v96
    %112 = vmatprep.subr.mxu0 0.0
    %113 = vmatpush1.msra.mxu0 %v97
    %114 = vmatprep.subr.mxu0 0.0
    %115 = vmatpush1.msra.mxu0 %v98
    %116 = vmatprep.subr.mxu0 0.0
    %117 = vmatpush1.msra.mxu0 0.0
    %118 = vmatprep.subr.mxu0 0.0
    %119 = vmatpush1.msra.mxu0 0.0
    %120 = vmatprep.subr.mxu0 0.0
    %121 = vmatpush1.msra.mxu0 0.0
    %122 = vmatprep.subr.mxu0 0.0
    %123 = vmatpush1.msra.mxu0 0.0
    %124 = vmatprep.subr.mxu0 0.0
    %125 = vmatpush1.msra.mxu0 0.0
    %126 = vmatprep.subr.mxu0 0.0
    %127 = vmatpush1.msra.mxu0 0.0
    %128 = vmatprep.subr.mxu0 0.0
    %129 = vmatpush1.msra.mxu0 0.0
    %130 = vmatprep.subr.mxu0 0.0
    %131 = vmatpush1.msra.mxu0 0.0
    %132 = vmatprep.subr.mxu0 0.0
    %133 = vmatpush1.msra.mxu0 0.0
    %134 = vmatprep.subr.mxu0 0.0
    %135 = vmatpush1.msra.mxu0 0.0
    %136 = vmatprep.subr.mxu0 0.0
    %137 = vmatpush1.msra.mxu0 0.0
    %138 = vmatprep.subr.mxu0 0.0
    %139 = vmatpush1.msra.mxu0 0.0
    %140 = vmatprep.subr.mxu0 0.0
    %141 = vmatpush1.msra.mxu0 0.0
    %142 = vmatprep.subr.mxu0 0.0
    %143 = vmatpush1.msra.mxu0 0.0
    %144 = vmatprep.subr.mxu0 0.0
    %145 = vmatpush1.msra.mxu0 0.0
    %146 = vmatprep.subr.mxu0 0.0
    %147 = vmatpush1.msra.mxu0 0.0
    %148 = vmatprep.subr.mxu0 0.0
    %149 = vmatpush1.msra.mxu0 0.0
    %150 = vmatprep.subr.mxu0 0.0
    %151 = vmatpush1.msra.mxu0 0.0
    %152 = vmatprep.subr.mxu0 0.0
    %153 = vmatpush1.msra.mxu0 0.0
    %154 = vmatprep.subr.mxu0 0.0
    %155 = vmatpush1.msra.mxu0 0.0
    %156 = vmatprep.subr.mxu0 0.0
    %157 = vmatpush1.msra.mxu0 0.0
    %158 = vmatprep.subr.mxu0 0.0
    %159 = vmatpush1.msra.mxu0 0.0
    %160 = vmatprep.subr.mxu0 0.0
    %161 = vmatpush1.msra.mxu0 0.0
    %162 = vmatprep.subr.mxu0 0.0
    %163 = vmatpush1.msra.mxu0 0.0
    %164 = vmatprep.subr.mxu0 0.0
    %165 = vmatpush1.msra.mxu0 0.0
    %166 = vmatprep.subr.mxu0 0.0
    %167 = vmatpush1.msra.mxu0 0.0
    %168 = vmatprep.subr.mxu0 0.0
    %169 = vmatpush1.msra.mxu0 0.0
    %170 = vmatprep.subr.mxu0 0.0
    %171 = vmatpush1.msra.mxu0 0.0
    %172 = vmatprep.mubr.f32.mxu0 0.0
    %173 = vmatmul.mubr.f32.gmra.mrb[0].mxu0 %v106
    %v174 = vpop.f32.mrb[0].mxu0
    %v175 = vadd.f32 %v103, %v174
    %v176 = vpop.f32.mrb[0].mxu0
    %177 = vdwg.mxu0
    %v178 = vtanh.pop %v175
    %v179 = vld [vmem:[%s1 + $0x40] sm:$0xff]
    %v180 = vld [vmem:[%s1 + $0x48] sm:$0xff]
    %v181 = vld [vmem:[%s1 + $0x50] sm:$0xff]
    %v182 = vld [vmem:[%s1 + $0x58] sm:$0xff]
    %v183 = vld [vmem:[%s1 + $0x60] sm:$0x1]
    %v184 = vlaneseq
    %v185 = vshrl.u32 %v184, 7
    %v186 = vsub.s32 0, %v185
    %v187 = vrot.slane %v183, %v186
    %v189 = vsel %vm104, %v178, 0
    %191 = vmatprep.subr.mxu0 0.0
    %192 = vmatpush1.msra.mxu0 %v179
    %193 = vmatprep.subr.mxu0 0.0
    %194 = vmatpush1.msra.mxu0 %v180
    %195 = vmatprep.subr.mxu0 0.0
    %196 = vmatpush1.msra.mxu0 %v181
    %197 = vmatprep.subr.mxu0 0.0
    %198 = vmatpush1.msra.mxu0 %v182
    %199 = vmatprep.subr.mxu0 0.0
    %200 = vmatpush1.msra.mxu0 0.0
    %201 = vmatprep.subr.mxu0 0.0
    %202 = vmatpush1.msra.mxu0 0.0
    %203 = vmatprep.subr.mxu0 0.0
    %204 = vmatpush1.msra.mxu0 0.0
    %205 = vmatprep.subr.mxu0 0.0
    %206 = vmatpush1.msra.mxu0 0.0
    %207 = vmatprep.subr.mxu0 0.0
    %208 = vmatpush1.msra.mxu0 0.0
    %209 = vmatprep.subr.mxu0 0.0
    %210 = vmatpush1.msra.mxu0 0.0
    %211 = vmatprep.subr.mxu0 0.0
    %212 = vmatpush1.msra.mxu0 0.0
    %213 = vmatprep.subr.mxu0 0.0
    %214 = vmatpush1.msra.mxu0 0.0
    %215 = vmatprep.subr.mxu0 0.0
    %216 = vmatpush1.msra.mxu0 0.0
    %217 = vmatprep.subr.mxu0 0.0
    %218 = vmatpush1.msra.mxu0 0.0
    %219 = vmatprep.subr.mxu0 0.0
    %220 = vmatpush1.msra.mxu0 0.0
    %221 = vmatprep.subr.mxu0 0.0
    %222 = vmatpush1.msra.mxu0 0.0
    %223 = vmatprep.subr.mxu0 0.0
    %224 = vmatpush1.msra.mxu0 0.0
    %225 = vmatprep.subr.mxu0 0.0
    %226 = vmatpush1.msra.mxu0 0.0
    %227 = vmatprep.subr.mxu0 0.0
    %228 = vmatpush1.msra.mxu0 0.0
    %229 = vmatprep.subr.mxu0 0.0
    %230 = vmatpush1.msra.mxu0 0.0
    %231 = vmatprep.subr.mxu0 0.0
    %232 = vmatpush1.msra.mxu0 0.0
    %233 = vmatprep.subr.mxu0 0.0
    %234 = vmatpush1.msra.mxu0 0.0
    %235 = vmatprep.subr.mxu0 0.0
    %236 = vmatpush1.msra.mxu0 0.0
    %237 = vmatprep.subr.mxu0 0.0
    %238 = vmatpush1.msra.mxu0 0.0
    %239 = vmatprep.subr.mxu0 0.0
    %240 = vmatpush1.msra.mxu0 0.0
    %241 = vmatprep.subr.mxu0 0.0
    %242 = vmatpush1.msra.mxu0 0.0
    %243 = vmatprep.subr.mxu0 0.0
    %244 = vmatpush1.msra.mxu0 0.0
    %245 = vmatprep.subr.mxu0 0.0
    %246 = vmatpush1.msra.mxu0 0.0
    %247 = vmatprep.subr.mxu0 0.0
    %248 = vmatpush1.msra.mxu0 0.0
    %249 = vmatprep.subr.mxu0 0.0
    %250 = vmatpush1.msra.mxu0 0.0
    %251 = vmatprep.subr.mxu0 0.0
    %252 = vmatpush1.msra.mxu0 0.0
    %253 = vmatprep.subr.mxu0 0.0
    %254 = vmatpush1.msra.mxu0 0.0
    %255 = vmatprep.mubr.f32.mxu0 0.0
    %256 = vmatmul.mubr.f32.gmra.mrb[0].mxu0 %v189
    %v257 = vpop.f32.mrb[0].mxu0
    %v258 = vadd.f32 %v187, %v257
    %v259 = vpop.f32.mrb[0].mxu0
    %260 = vdwg.mxu0
    %vm261 = vcmask 58368
    %v262 = vsel %vm261, %v258, -inf
    %263 = vmax.xlane.f32.xlu0 %v262
    %v264 = vpop.xlane.xlu0 %263
    %v265 = vsub.f32 %v258, %v264
    %v266 = vmul.f32 %v265, 1.442695
    %v267 = vpow.pop %v266
    %v268 = vsel %vm261, %v267, 0.0
    %269 = vadd.xlane.f32.xlu0 %v268
    %v270 = vpop.xlane.xlu0 %269
    %v271 = vrcp.pop %v270
    %v272 = vmul.f32 %v267, %v271
    %273 = vst.msk [vmem:[#allocation2] sm:$0x3] %vm261, %v272
    // Predicated region
    $region10: #{tpu_custom_call.1} parent=1 // pred_check
      _
    $region11: #{tpu_custom_call.1} parent=1 // pred_check_branch
      %275 = sbr.rel (0) target = $region13
    $region12: #{tpu_custom_call.1} parent=1 // pred_region
      %s277 = ssub.s32 32, 32
      %278 = vsyncadd [#allocation3], %s277
      %s280 = sshll.u32 [#allocation2], 4
      %s281 = int_to_ptr.vmem [resolvable:$true] %s280
      %283 = dma.vmem_to_hbm [thread:$0]  %s281, 32, %s2, [#allocation3]
    $region13: #{tpu_custom_call.1} parent=1 // pred_fallthru
      _
    // Predicated region
    $region14: #{tpu_custom_call.1} parent=1 // pred_check
      _
    $region15: #{tpu_custom_call.1} parent=1 // pred_check_branch
      %285 = sbr.rel (0) target = $region17
    $region16: #{tpu_custom_call.1} parent=1 // pred_region
      %286 = dma.done [#allocation3], 32
    $region17: #{tpu_custom_call.1} parent=1 // pred_fallthru
      _
    %287 = vsyncpa [#allocation3], 1

</llo_original>
